<compile_context>
chip_gen: v6e
topology: v6e:2x2x1
jax: 0.10.0
libtpu: 0.0.40
codegen_flags: <defaults>
</compile_context>

<pallas_src>
import functools
import math

import jax
import jax.numpy as jnp
from jax.experimental import pallas as pl
from jax.experimental.pallas import tpu as pltpu

LANE = 128
_MIB = 1 << 20


def _round_up(x, m):
    return ((x + m - 1) // m) * m


def _cdiv(a, b):
    return -(-a // b)


# ----------------------------------------------------------------------------
# Kernels
# ----------------------------------------------------------------------------
def _logreg_kernel_single_k(x_ref, w_ref, b_ref, o_ref, *, compute_dtype):
    # Single K block: no accumulator scratch, no zero-init, direct store.
    x = x_ref[...].astype(compute_dtype)          # in-kernel cast (free on VPU)
    o_ref[...] = (
        jnp.dot(x, w_ref[...], preferred_element_type=jnp.float32) + b_ref[...]
    ).astype(o_ref.dtype)


def _logreg_kernel_multi_k_acc(x_ref, w_ref, b_ref, o_ref, acc_ref, *,
                               compute_dtype):
    # grid = (batch tiles, K tiles); K (feature) axis is the reduction axis.
    k = pl.program_id(1)

    @pl.when(k == 0)
    def _():
        acc_ref[...] = jnp.zeros_like(acc_ref)

    acc_ref[...] += jnp.dot(
        x_ref[...].astype(compute_dtype), w_ref[...],
        preferred_element_type=jnp.float32,
    )

    @pl.when(k == pl.num_programs(1) - 1)
    def _():
        o_ref[...] = (acc_ref[...] + b_ref[...]).astype(o_ref.dtype)


def _logreg_kernel_multi_k_f32out(x_ref, w_ref, b_ref, o_ref, *,
                                  compute_dtype):
    # f32 output: accumulate directly into the (VMEM-resident) output block,
    # so no scratch accumulator / final copy is needed.
    k = pl.program_id(1)

    @pl.when(k == 0)
    def _():
        o_ref[...] = jnp.broadcast_to(b_ref[...], o_ref.shape)

    o_ref[...] += jnp.dot(
        x_ref[...].astype(compute_dtype), w_ref[...],
        preferred_element_type=jnp.float32,
    )


# ----------------------------------------------------------------------------
# Hardware / tiling helpers
# ----------------------------------------------------------------------------
def _tpu_vmem_bytes():
    """Physical VMEM per core; conservative (v7x-sized) fallback."""
    try:
        return int(pltpu.get_tpu_info().vmem_capacity_bytes)
    except Exception:
        return 64 * _MIB


def _pick_tile_k(nfeat, nclass_p, w_itemsize, vmem_cap_bytes):
    """Byte-based K tile: keep the whole W resident whenever it fits."""
    full_w_bytes = nfeat * nclass_p * w_itemsize
    w_budget = 8 * _MIB if vmem_cap_bytes <= 64 * _MIB else 16 * _MIB
    if full_w_bytes <= w_budget:
        return nfeat
    # Otherwise target ~4 MiB W blocks with a clean 128-multiple divisor of
    # nfeat (exact divisors only: ragged reduction tiles would need masking).
    target_k = max((4 * _MIB) // (nclass_p * w_itemsize), LANE)
    target_k = (target_k // LANE) * LANE
    for cand in range(target_k, 0, -LANE):
        if nfeat % cand == 0:
            return cand
    # TODO(synk): no clean 128-multiple divisor -> single full-K block; for
    # very large awkward nfeat this could exceed VMEM (pad nfeat upstream).
    return nfeat


def _pick_tile_n(tile_k, nclass_p, x_bytes, w_bytes, out_bytes, acc_needed,
                 vmem_budget_bytes):
    """Batch-axis tile sized against a generation-aware VMEM budget."""
    weight_bytes = 2 * tile_k * nclass_p * w_bytes          # double-buffered W
    row_bytes = (2 * tile_k * x_bytes                       # double-buffered x
                 + 2 * nclass_p * out_bytes                 # double-buffered out
                 + (nclass_p * 4 if acc_needed else 0))     # f32 acc row
    tile_n = (vmem_budget_bytes - weight_bytes) // max(row_bytes, 1)
    return int(min(max(tile_n, 16), 4096))


# ----------------------------------------------------------------------------
# Parameter preparation (one-time, hoisted out of the forward pass)
# ----------------------------------------------------------------------------
def prepare_logreg_params(weight, bias, *, compute_dtype=jnp.bfloat16):
    """Pad class axis to a multiple of 128 (lane-dense stores) and cast W.

    weight: [nfeat, nclass]; bias: [nclass].
    Returns (w_prepped [nfeat, nclass_p] compute_dtype,
             bias2d   [1, nclass_p] f32,
             nclass).
    Call once at init / param load, NOT per forward call.
    """
    nfeat, nclass = weight.shape
    nclass_p = _round_up(nclass, LANE)
    if nclass_p != nclass:
        weight = jnp.pad(weight, ((0, 0), (0, nclass_p - nclass)))
        bias = jnp.pad(bias, (0, nclass_p - nclass))
    w = weight.astype(compute_dtype)
    b2d = bias.reshape(1, nclass_p).astype(jnp.float32)
    return w, b2d, nclass


# ----------------------------------------------------------------------------
# Forward pass
# ----------------------------------------------------------------------------
def logreg_forward(seq, w_prepped, bias2d, nclass=None, *, tile_n=None,
                   out_dtype=None, return_padded=False):
    """seq: [N, nfeat] (any float dtype, cast to W's compute dtype in-kernel);
    w_prepped: [nfeat, nclass_p]; bias2d: [1, nclass_p] f32.
    Returns [N, nclass] (or [N, nclass_p] if return_padded=True, avoiding the
    extra de-pad slice pass when the consumer can ignore the zero columns).
    """
    N, nfeat = seq.shape
    kfeat, nclass_p = w_prepped.shape
    assert kfeat == nfeat, "weight feature dim must match seq"
    if nclass is None:
        nclass = nclass_p
    if out_dtype is None:
        out_dtype = seq.dtype

    compute_dtype = w_prepped.dtype            # bf16 by default (f32 escape hatch)
    x_bytes = jnp.dtype(seq.dtype).itemsize
    w_bytes = jnp.dtype(w_prepped.dtype).itemsize
    out_bytes = jnp.dtype(out_dtype).itemsize

    vmem_cap = _tpu_vmem_bytes()
    small_vmem = vmem_cap <= 64 * _MIB         # v7x-class chip

    # ---- K tiling (feature / reduction axis) --------------------------------
    tile_k = _pick_tile_k(nfeat, nclass_p, w_bytes, vmem_cap)
    k_tiles = _cdiv(nfeat, tile_k)
    multi_k = k_tiles > 1
    use_acc_scratch = multi_k and jnp.dtype(out_dtype) != jnp.dtype(jnp.float32)

    # ---- N tiling (batch axis) ----------------------------------------------
    vmem_budget = 40 * _MIB if small_vmem else 88 * _MIB
    if tile_n is None:
        tile_n = _pick_tile_n(tile_k, nclass_p, x_bytes, w_bytes, out_bytes,
                              use_acc_scratch, vmem_budget)
    # v7x: 2 TensorCores per chip -> make sure the parallel batch axis has at
    # least 2 grid steps so megacore sharding can actually split the work.
    if small_vmem and N > 16:
        tile_n = min(tile_n, _round_up(_cdiv(N, 2), 16))
    if tile_n >= N:
        tile_n = N                              # single full block (legal)
    else:
        tile_n = max((tile_n // 16) * 16, 16)   # sublane-aligned
        if tile_n >= N:
            tile_n = N
    n_tiles = _cdiv(N, tile_n)

    # ---- kernel variant + specs ---------------------------------------------
    if not multi_k:
        kernel = functools.partial(_logreg_kernel_single_k,
                                   compute_dtype=compute_dtype)
        grid = (n_tiles,)
        in_specs = [
            pl.BlockSpec((tile_n, nfeat), lambda i: (i, 0)),
            pl.BlockSpec((nfeat, nclass_p), lambda i: (0, 0)),   # W resident
            pl.BlockSpec((1, nclass_p), lambda i: (0, 0)),
        ]
        out_specs = pl.BlockSpec((tile_n, nclass_p), lambda i: (i, 0))
        scratch_shapes = []
        dim_sem = ("parallel",)
    else:
        grid = (n_tiles, k_tiles)
        in_specs = [
            pl.BlockSpec((tile_n, tile_k), lambda i, k: (i, k)),
            pl.BlockSpec((tile_k, nclass_p), lambda i, k: (k, 0)),
            pl.BlockSpec((1, nclass_p), lambda i, k: (0, 0)),
        ]
        out_specs = pl.BlockSpec((tile_n, nclass_p), lambda i, k: (i, 0))
        dim_sem = ("parallel", "arbitrary")
        if use_acc_scratch:
            kernel = functools.partial(_logreg_kernel_multi_k_acc,
                                       compute_dtype=compute_dtype)
            scratch_shapes = [pltpu.VMEM((tile_n, nclass_p), jnp.float32)]
        else:
            kernel = functools.partial(_logreg_kernel_multi_k_f32out,
                                       compute_dtype=compute_dtype)
            scratch_shapes = []
    # TODO(synk): on v7x, if xprof shows exposed DMA waits, deepen the x/out
    # pipelines via pipeline_mode=pl.Buffered(3) on those BlockSpecs.

    # ---- VMEM limit (estimate already counts double-buffering) --------------
    vmem_est = (2 * tile_n * tile_k * x_bytes
                + 2 * tile_k * nclass_p * w_bytes
                + 2 * tile_n * nclass_p * out_bytes
                + (tile_n * nclass_p * 4 if use_acc_scratch else 0)
                + 2 * nclass_p * 4)
    vmem_hard_cap = 48 * _MIB if small_vmem else 104 * _MIB
    vmem_limit = int(min(max(vmem_est + 4 * _MIB, 32 * _MIB), vmem_hard_cap))

    cost = pl.CostEstimate(
        flops=2 * N * nfeat * nclass_p,
        transcendentals=0,
        bytes_accessed=(N * nfeat * x_bytes
                        + nfeat * nclass_p * w_bytes
                        + N * nclass_p * out_bytes),
    )

    out_padded = pl.pallas_call(
        kernel,
        out_shape=jax.ShapeDtypeStruct((N, nclass_p), out_dtype),
        grid_spec=pltpu.PrefetchScalarGridSpec(
            num_scalar_prefetch=0,
            grid=grid,
            in_specs=in_specs,
            out_specs=out_specs,
            scratch_shapes=scratch_shapes,
        ),
        compiler_params=pltpu.CompilerParams(
            dimension_semantics=dim_sem,
            vmem_limit_bytes=vmem_limit,
        ),
        cost_estimate=cost,
    )(seq, w_prepped, bias2d)

    if return_padded or nclass_p == nclass:
        return out_padded
    return out_padded[:, :nclass]


# ----------------------------------------------------------------------------
# Init (matches LogReg.__init__: xavier_uniform_ weight, zero bias)
# ----------------------------------------------------------------------------
def init_logreg_params(key, nfeat, nclass, dtype=jnp.float32):
    # PyTorch xavier_uniform_ on weight [nclass, nfeat]:
    # gain=1, bound = sqrt(6 / (fan_in + fan_out)) = sqrt(6 / (nfeat + nclass))
    bound = math.sqrt(6.0 / (nfeat + nclass))
    w_torch_layout = jax.random.uniform(
        key, (nclass, nfeat), dtype=dtype, minval=-bound, maxval=bound
    )
    weight = w_torch_layout.T                 # stored as [nfeat, nclass]
    bias = jnp.zeros((nclass,), dtype=dtype)
    return weight, bias


if __name__ == "__main__":
    key = jax.random.PRNGKey(0)
    k_x, k_w = jax.random.split(key)

    N, nfeat, nclass = 8, 32, 16
    seq = jax.random.normal(k_x, (N, nfeat), dtype=jnp.float32)
    weight, bias = init_logreg_params(k_w, nfeat, nclass)

    # One-time parameter prep (hoisted out of the per-call path).
    w_prepped, bias2d, nclass_out = prepare_logreg_params(weight, bias)

    out = logreg_forward(seq, w_prepped, bias2d, nclass_out)
    out = jax.block_until_ready(out)

    # Reference with the same bf16-operand / f32-accumulate math as the kernel.
    ref_bf16 = (jnp.dot(seq.astype(jnp.bfloat16), weight.astype(jnp.bfloat16),
                        preferred_element_type=jnp.float32)
                + bias[None, :].astype(jnp.float32)).astype(seq.dtype)
    # Full-precision reference (loose tolerance; bf16 operand rounding only).
    ref_f32 = seq @ weight + bias[None, :]

    assert out.shape == (N, nclass)
    assert jnp.allclose(out, ref_bf16, atol=5e-3, rtol=5e-3)
    assert jnp.allclose(out, ref_f32, atol=5e-2, rtol=5e-2)

    print("KERNEL_OK")
</pallas_src>

<mosaic_0001>
module attributes {stable_mosaic.version = 11 : i64} {
  func.func @_logreg_kernel_single_k(%arg0: i32, %arg1: memref<8x32xf32, #tpu.memory_space<vmem>>, %arg2: memref<32x128xbf16, #tpu.memory_space<vmem>>, %arg3: memref<1x128xf32, #tpu.memory_space<vmem>>, %arg4: memref<8x128xf32, #tpu.memory_space<vmem>>) attributes {dimension_semantics = [#tpu.dimension_semantics<parallel>], iteration_bounds = array<i64: 1>, scalar_prefetch = 0 : i64, scratch_operands = 0 : i64, tpu.core_type = #tpu.core_type<tc>, window_params = [{transform_indices = @transform_0, window_bounds = array<i64: 8, 32>}, {pipeline_mode = #tpu.pipeline_mode<synchronous>, transform_indices = @transform_1, window_bounds = array<i64: 32, 128>}, {pipeline_mode = #tpu.pipeline_mode<synchronous>, transform_indices = @transform_2, window_bounds = array<i64: 1, 128>}, {transform_indices = @transform_3, window_bounds = array<i64: 8, 128>}]} {
    %c0 = arith.constant 0 : index
    %c0_0 = arith.constant 0 : index
    %0 = vector.load %arg1[%c0, %c0_0] : memref<8x32xf32, #tpu.memory_space<vmem>>, vector<8x32xf32>
    %1 = arith.truncf %0 : vector<8x32xf32> to vector<8x32xbf16>
    %c0_1 = arith.constant 0 : index
    %c0_2 = arith.constant 0 : index
    %2 = vector.load %arg2[%c0_1, %c0_2] : memref<32x128xbf16, #tpu.memory_space<vmem>>, vector<32x128xbf16>
    %cst = arith.constant dense<0.000000e+00> : vector<8x128xf32>
    %3 = tpu.matmul %1, %2, %cst {dimension_numbers = #tpu.dot_dimension_numbers<[1], [0], [0], [1], [0, 0, 1, 1], [], []>} : vector<8x32xbf16>, vector<32x128xbf16>, vector<8x128xf32> -> vector<8x128xf32>
    %c0_3 = arith.constant 0 : index
    %c0_4 = arith.constant 0 : index
    %4 = vector.load %arg3[%c0_3, %c0_4] : memref<1x128xf32, #tpu.memory_space<vmem>>, vector<1x128xf32>
    %5 = vector.broadcast %4 : vector<1x128xf32> to vector<8x128xf32>
    %6 = arith.addf %3, %5 : vector<8x128xf32>
    %c0_5 = arith.constant 0 : index
    %c0_6 = arith.constant 0 : index
    %7 = vector.load %arg4[%c0_5, %c0_6] : memref<8x128xf32, #tpu.memory_space<vmem>>, vector<8x128xf32>
    tpu.vector_store %arg4[%c0_5, %c0_6], %6 {strides = array<i32>} : memref<8x128xf32, #tpu.memory_space<vmem>>, vector<8x128xf32>,
    return
  }
  func.func @transform_0(%arg0: i32) -> (i32, i32) {
    %c0_i32 = arith.constant 0 : i32
    %c0_i32_0 = arith.constant 0 : i32
    return %arg0, %c0_i32 : i32, i32
  }
  func.func @transform_1(%arg0: i32) -> (i32, i32) {
    %c0_i32 = arith.constant 0 : i32
    %c0_i32_0 = arith.constant 0 : i32
    %c0_i32_1 = arith.constant 0 : i32
    return %c0_i32, %c0_i32_0 : i32, i32
  }
  func.func @transform_2(%arg0: i32) -> (i32, i32) {
    %c0_i32 = arith.constant 0 : i32
    %c0_i32_0 = arith.constant 0 : i32
    %c0_i32_1 = arith.constant 0 : i32
    return %c0_i32, %c0_i32_0 : i32, i32
  }
  func.func @transform_3(%arg0: i32) -> (i32, i32) {
    %c0_i32 = arith.constant 0 : i32
    %c0_i32_0 = arith.constant 0 : i32
    return %arg0, %c0_i32 : i32, i32
  }
}

</mosaic_0001>

<llo_original>
// kernel: tpu_custom_call.1
$region0: #{tpu_custom_call.1}
  #allocation0 [shape = 'u32[]', space=smem, size = 0x4, offset = 0x4, fixed_abs, tag = 'smem constant byte address 0x4 - core index']
  #allocation1 [shape = 'u32[144,128]{1,0:T(1,128)}', space=vmem, size = 0x12000, scoped, tag = 'internal scratch']
  %s0 = inlined_call_operand.hbm [shape: f32[8,32], index: 0, kind: input, shape index: {}]
  %s1 = inlined_call_operand.hbm [shape: bf16[32,128], index: 1, kind: input, shape index: {}]
  %s2 = inlined_call_operand.vmem [shape: f32[1,128], index: 2, kind: input, shape index: {}]
  %s3 = inlined_call_operand.hbm [shape: f32[8,128], index: 3, kind: output, shape index: {}]
  %s4 = sld [smem:[#allocation0]]
  $region30: #{tpu_custom_call.1} parent=0
    _
  %s6 = ssub.s32 1, %s4
  %s7 = scalar_select 0, %s6, %s4
  $region1: #{tpu_custom_call.1} parent=0
    #allocation2 [shape = 'u8[4096]{0}', space=vmem, size = 0x1000, scoped, tag = 'input window, operand 0, single buffered']
    #allocation3 [shape = 's32[1]{0}', space=sflag, size = 0x4, scoped, tag = 'scoped memory for tpu_custom_call.1']
    #allocation4 [shape = 's32[1]{0}', space=sflag, size = 0x4, scoped, tag = 'scoped memory for tpu_custom_call.1']
    #allocation5 [shape = 'u8[8192]{0}', space=vmem, size = 0x2000, scoped, tag = 'input window, operand 1, single buffered']
    #allocation6 [shape = 's32[1]{0}', space=sflag, size = 0x4, scoped, tag = 'scoped memory for tpu_custom_call.1']
    #allocation7 [shape = 'u8[4096]{0}', space=vmem, size = 0x1000, scoped, tag = 'output window, operand 0, single buffered']
    %8 = vsyncpa [#allocation3], 0
    %9 = vsyncpa [#allocation6], 0
    %10 = vsyncpa [#allocation4], 0
    // Predicated region
    $region2: #{tpu_custom_call.1} parent=1 // pred_check
      _
    $region3: #{tpu_custom_call.1} parent=1 // pred_check_branch
      %12 = sbr.rel (0) target = $region5
    $region4: #{tpu_custom_call.1} parent=1 // pred_region
      %s14 = ssub.s32 128, 128
      %15 = vsyncadd [#allocation3], %s14
      %s17 = sshll.u32 [#allocation2], 4
      %s18 = int_to_ptr.vmem [resolvable:$true] %s17
      %20 = dma.hbm_to_vmem [thread:$0]  %s0, 128, %s18, [#allocation3]
    $region5: #{tpu_custom_call.1} parent=1 // pred_fallthru
      _
    // Predicated region
    $region6: #{tpu_custom_call.1} parent=1 // pred_check
      _
    $region7: #{tpu_custom_call.1} parent=1 // pred_check_branch
      %22 = sbr.rel (0) target = $region9
    $region8: #{tpu_custom_call.1} parent=1 // pred_region
      %s24 = ssub.s32 256, 256
      %25 = vsyncadd [#allocation6], %s24
      %s26 = sshll.u32 [#allocation5], 4
      %s27 = int_to_ptr.vmem [resolvable:$true] %s26
      %32 = dma.hbm_to_vmem [thread:$0]  %s1, 256, %s27, [#allocation6], 64, 64, 4
    $region9: #{tpu_custom_call.1} parent=1 // pred_fallthru
      _
    // Predicated region
    $region10: #{tpu_custom_call.1} parent=1 // pred_check
      _
    $region11: #{tpu_custom_call.1} parent=1 // pred_check_branch
      %34 = sbr.rel (0) target = $region13
    $region12: #{tpu_custom_call.1} parent=1 // pred_region
      _
    $region13: #{tpu_custom_call.1} parent=1 // pred_fallthru
      _
    // Predicated region
    $region14: #{tpu_custom_call.1} parent=1 // pred_check
      _
    $region15: #{tpu_custom_call.1} parent=1 // pred_check_branch
      %36 = sbr.rel (0) target = $region17
    $region16: #{tpu_custom_call.1} parent=1 // pred_region
      %37 = dma.done [#allocation3], 128
    $region17: #{tpu_custom_call.1} parent=1 // pred_fallthru
      _
    // Predicated region
    $region18: #{tpu_custom_call.1} parent=1 // pred_check
      _
    $region19: #{tpu_custom_call.1} parent=1 // pred_check_branch
      %39 = sbr.rel (0) target = $region21
    $region20: #{tpu_custom_call.1} parent=1 // pred_region
      %40 = dma.done [#allocation6], 256
    $region21: #{tpu_custom_call.1} parent=1 // pred_fallthru
      _
    %v42 = vld [vmem:[#allocation2] sm:$0xff]
    %v43 = vpack.c.bf16 %v42, %v42
    %v44 = vld [vmem:[#allocation5] sm:$0xf]
    %v45 = vld [vmem:[#allocation5 + $0x4] sm:$0xf]
    %v46 = vld [vmem:[#allocation5 + $0x8] sm:$0xf]
    %v47 = vld [vmem:[#allocation5 + $0xc] sm:$0xf]
    %v48 = vld [vmem:[%s2] sm:$0x1]
    %v50 = vlaneseq
    %v51 = vshrl.u32 %v50, 7
    %v52 = vsub.s32 0, %v51
    %v53 = vrot.slane %v48, %v52
    %v59 = vunpack.c.l.b16 %v44
    %v60 = vunpack.c.l.b16 %v45
    %v61 = vunpack.c.l.b16 %v46
    %v62 = vunpack.c.l.b16 %v47
    %v63 = vpack.c.b16 %v60, %v59
    %v64 = vpack.c.b16 %v62, %v61
    %vm67 = vcmask 261120
    %v69 = vsel %vm67, %v43, 0
    %71 = vmatprep.subr.bf16.mxu0 0
    %72 = vmatpush1.bf16.msra.mxu0 0
    %73 = vmatprep.subr.bf16.mxu0 0
    %74 = vmatpush1.bf16.msra.mxu0 0
    %75 = vmatprep.subr.bf16.mxu0 0
    %76 = vmatpush1.bf16.msra.mxu0 0
    %77 = vmatprep.subr.bf16.mxu0 0
    %78 = vmatpush1.bf16.msra.mxu0 0
    %79 = vmatprep.subr.bf16.mxu0 0
    %80 = vmatpush1.bf16.msra.mxu0 0
    %81 = vmatprep.subr.bf16.mxu0 0
    %82 = vmatpush1.bf16.msra.mxu0 0
    %83 = vmatprep.subr.bf16.mxu0 0
    %84 = vmatpush1.bf16.msra.mxu0 %v64
    %85 = vmatprep.subr.bf16.mxu0 0
    %86 = vmatpush1.bf16.msra.mxu0 %v63
    %87 = vmatprep.subr.bf16.mxu0 0
    %88 = vmatpush2.bf16.msra.mxu0 0
    %89 = vmatprep.subr.bf16.mxu0 0
    %90 = vmatpush2.bf16.msra.mxu0 0
    %91 = vmatprep.subr.bf16.mxu0 0
    %92 = vmatpush2.bf16.msra.mxu0 0
    %93 = vmatprep.subr.bf16.mxu0 0
    %94 = vmatpush2.bf16.msra.mxu0 0
    %95 = vmatprep.subr.bf16.mxu0 0
    %96 = vmatpush2.bf16.msra.mxu0 0
    %97 = vmatprep.subr.bf16.mxu0 0
    %98 = vmatpush2.bf16.msra.mxu0 0
    %99 = vmatprep.subr.bf16.mxu0 0
    %100 = vmatpush2.bf16.msra.mxu0 0
    %101 = vmatprep.subr.bf16.mxu0 0
    %102 = vmatpush2.bf16.msra.mxu0 0
    %103 = vmatprep.mubr.bf16.mxu0 0
    %104 = vmatmul.mubr.bf16.gmra.mxu0 %v69
    %v105 = vpop.f32.mrf.mxu0
    %v106 = vadd.f32 %v53, %v105
    %v107 = vpop.f32.mrf.mxu0
    %v108 = vpop.f32.mrf.mxu0
    %v109 = vpop.f32.mrf.mxu0
    %110 = vdwg.mxu0
    %111 = vst [vmem:[#allocation7] sm:$0xff] %v106
    // Predicated region
    $region22: #{tpu_custom_call.1} parent=1 // pred_check
      _
    $region23: #{tpu_custom_call.1} parent=1 // pred_check_branch
      %113 = sbr.rel (0) target = $region25
    $region24: #{tpu_custom_call.1} parent=1 // pred_region
      %s115 = ssub.s32 128, 128
      %116 = vsyncadd [#allocation4], %s115
      %s118 = sshll.u32 [#allocation7], 4
      %s119 = int_to_ptr.vmem [resolvable:$true] %s118
      %121 = dma.vmem_to_hbm [thread:$0]  %s119, 128, %s3, [#allocation4]
    $region25: #{tpu_custom_call.1} parent=1 // pred_fallthru
      _
    // Predicated region
    $region26: #{tpu_custom_call.1} parent=1 // pred_check
      _
    $region27: #{tpu_custom_call.1} parent=1 // pred_check_branch
      %123 = sbr.rel (0) target = $region29
    $region28: #{tpu_custom_call.1} parent=1 // pred_region
      %124 = dma.done [#allocation4], 128
    $region29: #{tpu_custom_call.1} parent=1 // pred_fallthru
      _
    %125 = vsyncpa [#allocation3], 1
    %126 = vsyncpa [#allocation6], 1
    %127 = vsyncpa [#allocation4], 1

</llo_original>
